<compile_context>
chip_gen: v6e
topology: v6e:2x2x1
jax: 0.10.0
libtpu: 0.0.40
codegen_flags: <defaults>
</compile_context>

<pallas_src>
import numpy as np

import jax
import jax.numpy as jnp
from jax.experimental import pallas as pl
from jax.experimental.pallas import tpu as pltpu


def mha_kernel(x_ref, y_ref, wq_ref, bq_ref, wkv_ref, bkv_ref,
               gsum_ref, gden_ref, fold_ref, o_ref):
    """One grid step handles a tile of TB batch rows.

    x_ref, y_ref : [TB, H] f32    sa_hidden / state_hidden tiles
    wq_ref       : [H, E]  bf16   Wq^T @ A, pre-scaled by 1/sqrt(head_dim)
    bq_ref       : [1, E]  f32
    wkv_ref      : [H, 2E] bf16   [Wk^T @ B | Wv^T @ B] fused
    bkv_ref      : [1, 2E] f32
    gsum_ref     : [E, E]  bf16   0/1: per-(h,g) sum over d, replicated
    gden_ref     : [E, L]  bf16   0/1: per-head denominator -> output columns
    fold_ref     : [E, L]  bf16   0/1: sum over g + PyTorch head interleave
    o_ref        : [TB, L] f32    lane-dense (L = 128-padded hidden_dim)
    where E = num_heads * num_heads * head_dim.
    """
    xb = x_ref[...].astype(jnp.bfloat16)
    yb = y_ref[...].astype(jnp.bfloat16)

    # Expanded Q projection (scale already folded into the weights/bias).
    qe = jnp.dot(xb, wq_ref[...], preferred_element_type=jnp.float32) + bq_ref[...]

    # Fused K|V projection: one MXU pass with N = 2E, then static lane-aligned
    # slices (no cross-tile boundary at lane 128 multiples).
    kve = jnp.dot(yb, wkv_ref[...], preferred_element_type=jnp.float32) + bkv_ref[...]
    E = gsum_ref.shape[0]
    ke = kve[:, :E]
    ve = kve[:, E:]

    # Per-(head, head) attention scores, replicated over head_dim.
    e = jnp.dot((qe * ke).astype(jnp.bfloat16), gsum_ref[...],
                preferred_element_type=jnp.float32)

    # Numerically-stable softmax (kept in f32).  Floor the shifted scores so a
    # head whose scores all sit far below the global row max still gets a
    # strictly positive denominator (no 0/0 NaN).
    e = jnp.maximum(e - jnp.max(e, axis=1, keepdims=True), -60.0)
    p = jnp.exp(e)

    # Unnormalized output with the PyTorch transpose(1,2).view() interleave
    # folded into `fold` (columns padded to 128 lanes), plus the per-head
    # denominator mapped onto the same interleaved columns.
    out_u = jnp.dot((p * ve).astype(jnp.bfloat16), fold_ref[...],
                    preferred_element_type=jnp.float32)
    denom = jnp.dot(p.astype(jnp.bfloat16), gden_ref[...],
                    preferred_element_type=jnp.float32)

    # Single full-width (128-lane) store; reciprocal goes to the EUP slot.
    o_ref[...] = (out_u * pl.reciprocal(denom, approx=True)).astype(o_ref.dtype)


def _build_selectors(num_heads, head_dim, out_lanes):
    """Constant 0/1 selector matrices (numpy, built once, exact in bf16)."""
    H = num_heads * head_dim
    E = num_heads * num_heads * head_dim

    a_mat = np.zeros((H, E), np.float32)      # Q expansion: Qe[., (h,g,d)] = Q[., h*hd+d]
    b_mat = np.zeros((H, E), np.float32)      # K/V expansion: Ke[., (h,g,d)] = K[., g*hd+d]
    gsum = np.zeros((E, E), np.float32)       # sum over d within (h,g), replicated
    gden_fold = np.zeros((E, out_lanes), np.float32)  # per-head denom -> interleaved cols
    fold = np.zeros((E, out_lanes), np.float32)       # sum over g + interleave d*nh+h

    for h in range(num_heads):
        for g in range(num_heads):
            blk = (h * num_heads + g) * head_dim
            for d in range(head_dim):
                idx = blk + d
                a_mat[h * head_dim + d, idx] = 1.0
                b_mat[g * head_dim + d, idx] = 1.0
                fold[idx, d * num_heads + h] = 1.0
                # Representative d'=0 of each (h,g) score feeds every
                # interleaved output column of head h -> exact per-head denom.
                gden_fold[blk, d * num_heads + h] = 1.0
            gsum[blk:blk + head_dim, blk:blk + head_dim] = 1.0

    # Keep the padded output lanes' denominator strictly positive (avoids
    # 0 * inf -> NaN); their fold columns are all-zero so the pad stays 0.
    if out_lanes > H:
        gden_fold[0, H:] = 1.0

    return a_mat, b_mat, gsum, gden_fold, fold


def prepare_mha_params(params, num_heads):
    """Weight-only preprocessing (cached in real use).

    Folds head-expansion selectors and the 1/sqrt(head_dim) scale into the
    Linear weights (in f32), fuses K|V, then casts the matmul operands to
    bf16.  Biases stay f32 (added after the f32-accumulating dots).
    """
    H = params["wq"].shape[0]
    assert H % num_heads == 0
    head_dim = H // num_heads
    out_lanes = max(128, ((H + 127) // 128) * 128)   # lane-dense output width

    a_np, b_np, gsum_np, gden_np, fold_np = _build_selectors(
        num_heads, head_dim, out_lanes)
    a_mat = jnp.asarray(a_np)
    b_mat = jnp.asarray(b_np)
    scale = 1.0 / (head_dim ** 0.5)

    wq_e = (scale * params["wq"].astype(jnp.float32).T) @ a_mat      # [H, E]
    bq_e = (scale * params["bq"].astype(jnp.float32)[None, :]) @ a_mat
    wk_e = params["wk"].astype(jnp.float32).T @ b_mat
    wv_e = params["wv"].astype(jnp.float32).T @ b_mat
    bk_e = params["bk"].astype(jnp.float32)[None, :] @ b_mat
    bv_e = params["bv"].astype(jnp.float32)[None, :] @ b_mat

    return {
        "wq_e": wq_e.astype(jnp.bfloat16),                            # [H, E]
        "bq_e": bq_e.astype(jnp.float32),                             # [1, E]
        "wkv_e": jnp.concatenate([wk_e, wv_e], axis=1).astype(jnp.bfloat16),  # [H, 2E]
        "bkv_e": jnp.concatenate([bk_e, bv_e], axis=1).astype(jnp.float32),   # [1, 2E]
        "gsum": jnp.asarray(gsum_np, jnp.bfloat16),                   # [E, E]
        "gden_fold": jnp.asarray(gden_np, jnp.bfloat16),              # [E, L]
        "fold": jnp.asarray(fold_np, jnp.bfloat16),                   # [E, L]
        "hidden_dim": H,
        "out_lanes": out_lanes,
        "num_heads": num_heads,
        "head_dim": head_dim,
    }


def _pick_batch_tile(B, batch_tile=None):
    if batch_tile is None:
        if B < 16 or B % 8 != 0:
            batch_tile = B                       # single step; block == full array
        else:
            # >=2 grid steps (v7x megacore + pipelining), <=512 rows per step.
            batch_tile = min(512, B // 2)
            batch_tile -= batch_tile % 8
            while B % batch_tile:
                batch_tile -= 8
    assert batch_tile == B or (batch_tile % 8 == 0 and B % batch_tile == 0), (
        "batch_tile must be B or a multiple of 8 that divides B")
    return batch_tile


def multi_head_attention(sa, state, prepared, *, batch_tile=None):
    B, H = sa.shape
    assert H == prepared["hidden_dim"]
    E = prepared["gsum"].shape[0]
    L = prepared["out_lanes"]
    tb = _pick_batch_tile(B, batch_tile)

    out_padded = pl.pallas_call(
        mha_kernel,
        out_shape=jax.ShapeDtypeStruct((B, L), sa.dtype),
        grid_spec=pltpu.PrefetchScalarGridSpec(
            num_scalar_prefetch=0,
            grid=(B // tb,),
            in_specs=[
                pl.BlockSpec((tb, H), lambda i: (i, 0)),     # sa_hidden
                pl.BlockSpec((tb, H), lambda i: (i, 0)),     # state_hidden
                pl.BlockSpec((H, E), lambda i: (0, 0)),      # wq_e (bf16)
                pl.BlockSpec((1, E), lambda i: (0, 0)),      # bq_e (f32)
                pl.BlockSpec((H, 2 * E), lambda i: (0, 0)),  # wkv_e (bf16)
                pl.BlockSpec((1, 2 * E), lambda i: (0, 0)),  # bkv_e (f32)
                pl.BlockSpec((E, E), lambda i: (0, 0)),      # gsum
                pl.BlockSpec((E, L), lambda i: (0, 0)),      # gden_fold
                pl.BlockSpec((E, L), lambda i: (0, 0)),      # fold
            ],
            out_specs=pl.BlockSpec((tb, L), lambda i: (i, 0)),
        ),
        compiler_params=pltpu.CompilerParams(
            dimension_semantics=("parallel",),
            vmem_limit_bytes=32 * 1024 * 1024,
        ),
    )(
        sa, state,
        prepared["wq_e"], prepared["bq_e"],
        prepared["wkv_e"], prepared["bkv_e"],
        prepared["gsum"], prepared["gden_fold"], prepared["fold"],
    )
    # Drop the lane padding; for row-major HBM this is cheap layout plumbing.
    return out_padded[:, :H]


def mha_reference(sa, state, params, num_heads):
    """Pure-JAX reference mirroring the PyTorch forward."""
    B, H = sa.shape
    hd = H // num_heads
    q = sa @ params["wq"].T + params["bq"]
    k = state @ params["wk"].T + params["bk"]
    v = state @ params["wv"].T + params["bv"]
    q = q.reshape(B, num_heads, hd)
    k = k.reshape(B, num_heads, hd)
    v = v.reshape(B, num_heads, hd)
    energy = jnp.einsum("bhd,bgd->bhg", q, k) / (hd ** 0.5)
    attn = jax.nn.softmax(energy, axis=-1)
    out = jnp.einsum("bhg,bgd->bhd", attn, v)
    return out.transpose(0, 2, 1).reshape(B, H)


if __name__ == "__main__":
    hidden_dim = 32
    num_heads = 4

    key = jax.random.PRNGKey(0)
    ks = jax.random.split(key, 6)
    bound = 1.0 / (hidden_dim ** 0.5)   # PyTorch nn.Linear default init range
    params = {
        "wq": jax.random.uniform(ks[0], (hidden_dim, hidden_dim), jnp.float32, -bound, bound),
        "bq": jax.random.uniform(ks[1], (hidden_dim,), jnp.float32, -bound, bound),
        "wk": jax.random.uniform(ks[2], (hidden_dim, hidden_dim), jnp.float32, -bound, bound),
        "bk": jax.random.uniform(ks[3], (hidden_dim,), jnp.float32, -bound, bound),
        "wv": jax.random.uniform(ks[4], (hidden_dim, hidden_dim), jnp.float32, -bound, bound),
        "bv": jax.random.uniform(ks[5], (hidden_dim,), jnp.float32, -bound, bound),
    }

    # One-time, weight-only preprocessing (selector folding + bf16 cast).
    prepared = prepare_mha_params(params, num_heads)

    # Small shape (single grid step) and a larger batch that exercises the
    # multi-step parallel grid (v7x megacore / pipelining path).
    for batch in (8, 256):
        k1, k2 = jax.random.split(jax.random.fold_in(key, batch))
        sa_hidden = jax.random.normal(k1, (batch, hidden_dim), jnp.float32)
        state_hidden = jax.random.normal(k2, (batch, hidden_dim), jnp.float32)

        out = multi_head_attention(sa_hidden, state_hidden, prepared)
        out = jax.block_until_ready(out)

        ref = mha_reference(sa_hidden, state_hidden, params, num_heads)
        assert out.shape == (batch, hidden_dim)
        max_err = float(jnp.max(jnp.abs(out - ref)))
        mean_err = float(jnp.mean(jnp.abs(out - ref)))
        # bf16 matmul operands + approx reciprocal -> relaxed tolerance.
        assert max_err < 1e-1 and mean_err < 1.5e-2, (
            f"B={batch}: max abs err {max_err}, mean abs err {mean_err}")

    print("KERNEL_OK")
</pallas_src>

<mosaic_0001>
module attributes {stable_mosaic.version = 11 : i64} {
  func.func @mha_kernel(%arg0: i32, %arg1: memref<8x32xf32, #tpu.memory_space<vmem>>, %arg2: memref<8x32xf32, #tpu.memory_space<vmem>>, %arg3: memref<32x128xbf16, #tpu.memory_space<vmem>>, %arg4: memref<1x128xf32, #tpu.memory_space<vmem>>, %arg5: memref<32x256xbf16, #tpu.memory_space<vmem>>, %arg6: memref<1x256xf32, #tpu.memory_space<vmem>>, %arg7: memref<128x128xbf16, #tpu.memory_space<vmem>>, %arg8: memref<128x128xbf16, #tpu.memory_space<vmem>>, %arg9: memref<128x128xbf16, #tpu.memory_space<vmem>>, %arg10: memref<8x128xf32, #tpu.memory_space<vmem>>) attributes {dimension_semantics = [#tpu.dimension_semantics<parallel>], iteration_bounds = array<i64: 1>, scalar_prefetch = 0 : i64, scratch_operands = 0 : i64, tpu.core_type = #tpu.core_type<tc>, window_params = [{transform_indices = @transform_0, window_bounds = array<i64: 8, 32>}, {transform_indices = @transform_1, window_bounds = array<i64: 8, 32>}, {pipeline_mode = #tpu.pipeline_mode<synchronous>, transform_indices = @transform_2, window_bounds = array<i64: 32, 128>}, {pipeline_mode = #tpu.pipeline_mode<synchronous>, transform_indices = @transform_3, window_bounds = array<i64: 1, 128>}, {pipeline_mode = #tpu.pipeline_mode<synchronous>, transform_indices = @transform_4, window_bounds = array<i64: 32, 256>}, {pipeline_mode = #tpu.pipeline_mode<synchronous>, transform_indices = @transform_5, window_bounds = array<i64: 1, 256>}, {pipeline_mode = #tpu.pipeline_mode<synchronous>, transform_indices = @transform_6, window_bounds = array<i64: 128, 128>}, {pipeline_mode = #tpu.pipeline_mode<synchronous>, transform_indices = @transform_7, window_bounds = array<i64: 128, 128>}, {pipeline_mode = #tpu.pipeline_mode<synchronous>, transform_indices = @transform_8, window_bounds = array<i64: 128, 128>}, {transform_indices = @transform_9, window_bounds = array<i64: 8, 128>}]} {
    %c0 = arith.constant 0 : index
    %c0_0 = arith.constant 0 : index
    %0 = vector.load %arg1[%c0, %c0_0] : memref<8x32xf32, #tpu.memory_space<vmem>>, vector<8x32xf32>
    %1 = arith.truncf %0 : vector<8x32xf32> to vector<8x32xbf16>
    %c0_1 = arith.constant 0 : index
    %c0_2 = arith.constant 0 : index
    %2 = vector.load %arg2[%c0_1, %c0_2] : memref<8x32xf32, #tpu.memory_space<vmem>>, vector<8x32xf32>
    %3 = arith.truncf %2 : vector<8x32xf32> to vector<8x32xbf16>
    %c0_3 = arith.constant 0 : index
    %c0_4 = arith.constant 0 : index
    %4 = vector.load %arg3[%c0_3, %c0_4] : memref<32x128xbf16, #tpu.memory_space<vmem>>, vector<32x128xbf16>
    %cst = arith.constant dense<0.000000e+00> : vector<8x128xf32>
    %5 = tpu.matmul %1, %4, %cst {dimension_numbers = #tpu.dot_dimension_numbers<[1], [0], [0], [1], [0, 0, 1, 1], [], []>} : vector<8x32xbf16>, vector<32x128xbf16>, vector<8x128xf32> -> vector<8x128xf32>
    %c0_5 = arith.constant 0 : index
    %c0_6 = arith.constant 0 : index
    %6 = vector.load %arg4[%c0_5, %c0_6] : memref<1x128xf32, #tpu.memory_space<vmem>>, vector<1x128xf32>
    %7 = vector.broadcast %6 : vector<1x128xf32> to vector<8x128xf32>
    %8 = arith.addf %5, %7 : vector<8x128xf32>
    %c0_7 = arith.constant 0 : index
    %c0_8 = arith.constant 0 : index
    %9 = vector.load %arg5[%c0_7, %c0_8] : memref<32x256xbf16, #tpu.memory_space<vmem>>, vector<32x256xbf16>
    %cst_9 = arith.constant dense<0.000000e+00> : vector<8x256xf32>
    %10 = tpu.matmul %3, %9, %cst_9 {dimension_numbers = #tpu.dot_dimension_numbers<[1], [0], [0], [1], [0, 0, 1, 1], [], []>} : vector<8x32xbf16>, vector<32x256xbf16>, vector<8x256xf32> -> vector<8x256xf32>
    %c0_10 = arith.constant 0 : index
    %c0_11 = arith.constant 0 : index
    %11 = vector.load %arg6[%c0_10, %c0_11] : memref<1x256xf32, #tpu.memory_space<vmem>>, vector<1x256xf32>
    %12 = vector.broadcast %11 : vector<1x256xf32> to vector<8x256xf32>
    %13 = arith.addf %10, %12 : vector<8x256xf32>
    %14 = vector.extract_strided_slice %13 {offsets = [0, 0], sizes = [8, 128], strides = [1, 1]} : vector<8x256xf32> to vector<8x128xf32>
    %15 = vector.extract_strided_slice %13 {offsets = [0, 128], sizes = [8, 128], strides = [1, 1]} : vector<8x256xf32> to vector<8x128xf32>
    %16 = arith.mulf %8, %14 : vector<8x128xf32>
    %17 = arith.truncf %16 : vector<8x128xf32> to vector<8x128xbf16>
    %c0_12 = arith.constant 0 : index
    %c0_13 = arith.constant 0 : index
    %18 = vector.load %arg7[%c0_12, %c0_13] : memref<128x128xbf16, #tpu.memory_space<vmem>>, vector<128x128xbf16>
    %cst_14 = arith.constant dense<0.000000e+00> : vector<8x128xf32>
    %19 = tpu.matmul %17, %18, %cst_14 {dimension_numbers = #tpu.dot_dimension_numbers<[1], [0], [0], [1], [0, 0, 1, 1], [], []>} : vector<8x128xbf16>, vector<128x128xbf16>, vector<8x128xf32> -> vector<8x128xf32>
    %cst_15 = arith.constant dense<0xFF800000> : vector<8xf32>
    %20 = vector.multi_reduction <maximumf>, %19, %cst_15 [1] : vector<8x128xf32> to vector<8xf32>
    %21 = vector.shape_cast %20 : vector<8xf32> to vector<8x1xf32>
    %22 = vector.broadcast %21 : vector<8x1xf32> to vector<8x128xf32>
    %23 = arith.subf %19, %22 : vector<8x128xf32>
    %cst_16 = arith.constant -6.000000e+01 : f32
    %24 = vector.broadcast %cst_16 : f32 to vector<8x128xf32>
    %25 = arith.maximumf %23, %24 : vector<8x128xf32>
    %26 = math.exp %25 : vector<8x128xf32>
    %27 = arith.mulf %26, %15 : vector<8x128xf32>
    %28 = arith.truncf %27 : vector<8x128xf32> to vector<8x128xbf16>
    %c0_17 = arith.constant 0 : index
    %c0_18 = arith.constant 0 : index
    %29 = vector.load %arg9[%c0_17, %c0_18] : memref<128x128xbf16, #tpu.memory_space<vmem>>, vector<128x128xbf16>
    %cst_19 = arith.constant dense<0.000000e+00> : vector<8x128xf32>
    %30 = tpu.matmul %28, %29, %cst_19 {dimension_numbers = #tpu.dot_dimension_numbers<[1], [0], [0], [1], [0, 0, 1, 1], [], []>} : vector<8x128xbf16>, vector<128x128xbf16>, vector<8x128xf32> -> vector<8x128xf32>
    %31 = arith.truncf %26 : vector<8x128xf32> to vector<8x128xbf16>
    %c0_20 = arith.constant 0 : index
    %c0_21 = arith.constant 0 : index
    %32 = vector.load %arg8[%c0_20, %c0_21] : memref<128x128xbf16, #tpu.memory_space<vmem>>, vector<128x128xbf16>
    %cst_22 = arith.constant dense<0.000000e+00> : vector<8x128xf32>
    %33 = tpu.matmul %31, %32, %cst_22 {dimension_numbers = #tpu.dot_dimension_numbers<[1], [0], [0], [1], [0, 0, 1, 1], [], []>} : vector<8x128xbf16>, vector<128x128xbf16>, vector<8x128xf32> -> vector<8x128xf32>
    %34 = tpu.reciprocal %33 {approx = true} : vector<8x128xf32> -> vector<8x128xf32>
    %35 = arith.mulf %30, %34 : vector<8x128xf32>
    %c0_23 = arith.constant 0 : index
    %c0_24 = arith.constant 0 : index
    %36 = vector.load %arg10[%c0_23, %c0_24] : memref<8x128xf32, #tpu.memory_space<vmem>>, vector<8x128xf32>
    tpu.vector_store %arg10[%c0_23, %c0_24], %35 {strides = array<i32>} : memref<8x128xf32, #tpu.memory_space<vmem>>, vector<8x128xf32>,
    return
  }
  func.func @transform_0(%arg0: i32) -> (i32, i32) {
    %c0_i32 = arith.constant 0 : i32
    %c0_i32_0 = arith.constant 0 : i32
    return %arg0, %c0_i32 : i32, i32
  }
  func.func @transform_1(%arg0: i32) -> (i32, i32) {
    %c0_i32 = arith.constant 0 : i32
    %c0_i32_0 = arith.constant 0 : i32
    return %arg0, %c0_i32 : i32, i32
  }
  func.func @transform_2(%arg0: i32) -> (i32, i32) {
    %c0_i32 = arith.constant 0 : i32
    %c0_i32_0 = arith.constant 0 : i32
    %c0_i32_1 = arith.constant 0 : i32
    return %c0_i32, %c0_i32_0 : i32, i32
  }
  func.func @transform_3(%arg0: i32) -> (i32, i32) {
    %c0_i32 = arith.constant 0 : i32
    %c0_i32_0 = arith.constant 0 : i32
    %c0_i32_1 = arith.constant 0 : i32
    return %c0_i32, %c0_i32_0 : i32, i32
  }
  func.func @transform_4(%arg0: i32) -> (i32, i32) {
    %c0_i32 = arith.constant 0 : i32
    %c0_i32_0 = arith.constant 0 : i32
    %c0_i32_1 = arith.constant 0 : i32
    return %c0_i32, %c0_i32_0 : i32, i32
  }
  func.func @transform_5(%arg0: i32) -> (i32, i32) {
    %c0_i32 = arith.constant 0 : i32
    %c0_i32_0 = arith.constant 0 : i32
    %c0_i32_1 = arith.constant 0 : i32
    return %c0_i32, %c0_i32_0 : i32, i32
  }
  func.func @transform_6(%arg0: i32) -> (i32, i32) {
    %c0_i32 = arith.constant 0 : i32
    %c0_i32_0 = arith.constant 0 : i32
    %c0_i32_1 = arith.constant 0 : i32
    return %c0_i32, %c0_i32_0 : i32, i32
  }
  func.func @transform_7(%arg0: i32) -> (i32, i32) {
    %c0_i32 = arith.constant 0 : i32
    %c0_i32_0 = arith.constant 0 : i32
    %c0_i32_1 = arith.constant 0 : i32
    return %c0_i32, %c0_i32_0 : i32, i32
  }
  func.func @transform_8(%arg0: i32) -> (i32, i32) {
    %c0_i32 = arith.constant 0 : i32
    %c0_i32_0 = arith.constant 0 : i32
    %c0_i32_1 = arith.constant 0 : i32
    return %c0_i32, %c0_i32_0 : i32, i32
  }
  func.func @transform_9(%arg0: i32) -> (i32, i32) {
    %c0_i32 = arith.constant 0 : i32
    %c0_i32_0 = arith.constant 0 : i32
    return %arg0, %c0_i32 : i32, i32
  }
}

</mosaic_0001>

<llo_original>
// kernel: tpu_custom_call.1
$region0: #{tpu_custom_call.1}
  #allocation0 [shape = 'u32[]', space=smem, size = 0x4, offset = 0x4, fixed_abs, tag = 'smem constant byte address 0x4 - core index']
  #allocation1 [shape = 'u32[144,128]{1,0:T(1,128)}', space=vmem, size = 0x12000, scoped, tag = 'internal scratch']
  %s0 = inlined_call_operand.hbm [shape: f32[8,32], index: 0, kind: input, shape index: {}]
  %s1 = inlined_call_operand.hbm [shape: f32[8,32], index: 1, kind: input, shape index: {}]
  %s2 = inlined_call_operand.hbm [shape: bf16[32,128], index: 2, kind: input, shape index: {}]
  %s3 = inlined_call_operand.vmem [shape: f32[1,128], index: 3, kind: input, shape index: {}]
  %s4 = inlined_call_operand.hbm [shape: bf16[32,256], index: 4, kind: input, shape index: {}]
  %s5 = inlined_call_operand.vmem [shape: f32[1,256], index: 5, kind: input, shape index: {}]
  %s6 = inlined_call_operand.hbm [shape: bf16[128,128], index: 6, kind: input, shape index: {}]
  %s7 = inlined_call_operand.hbm [shape: bf16[128,128], index: 7, kind: input, shape index: {}]
  %s8 = inlined_call_operand.hbm [shape: bf16[128,128], index: 8, kind: input, shape index: {}]
  %s9 = inlined_call_operand.hbm [shape: f32[8,128], index: 9, kind: output, shape index: {}]
  %s10 = sld [smem:[#allocation0]]
  $region74: #{tpu_custom_call.1} parent=0
    _
  %s12 = ssub.s32 1, %s10
  %s13 = scalar_select 0, %s12, %s10
  $region1: #{tpu_custom_call.1} parent=0
    #allocation2 [shape = 'u8[4096]{0}', space=vmem, size = 0x1000, scoped, tag = 'input window, operand 0, single buffered']
    #allocation3 [shape = 's32[1]{0}', space=sflag, size = 0x4, scoped, tag = 'scoped memory for tpu_custom_call.1']
    #allocation4 [shape = 's32[1]{0}', space=sflag, size = 0x4, scoped, tag = 'scoped memory for tpu_custom_call.1']
    #allocation5 [shape = 'u8[4096]{0}', space=vmem, size = 0x1000, scoped, tag = 'input window, operand 1, single buffered']
    #allocation6 [shape = 's32[1]{0}', space=sflag, size = 0x4, scoped, tag = 'scoped memory for tpu_custom_call.1']
    #allocation7 [shape = 'u8[8192]{0}', space=vmem, size = 0x2000, scoped, tag = 'input window, operand 2, single buffered']
    #allocation8 [shape = 'u8[16384]{0}', space=vmem, size = 0x4000, scoped, tag = 'input window, operand 4, single buffered']
    #allocation9 [shape = 's32[1]{0}', space=sflag, size = 0x4, scoped, tag = 'scoped memory for tpu_custom_call.1']
    #allocation10 [shape = 'u8[32768]{0}', space=vmem, size = 0x8000, scoped, tag = 'input window, operand 6, single buffered']
    #allocation11 [shape = 'u8[32768]{0}', space=vmem, size = 0x8000, scoped, tag = 'input window, operand 7, single buffered']
    #allocation12 [shape = 's32[1]{0}', space=sflag, size = 0x4, scoped, tag = 'scoped memory for tpu_custom_call.1']
    #allocation13 [shape = 'u8[32768]{0}', space=vmem, size = 0x8000, scoped, tag = 'input window, operand 8, single buffered']
    #allocation14 [shape = 'u8[4096]{0}', space=vmem, size = 0x1000, scoped, tag = 'output window, operand 0, single buffered']
    %14 = vsyncpa [#allocation3], 0
    %15 = vsyncpa [#allocation6], 0
    %16 = vsyncpa [#allocation9], 0
    %17 = vsyncpa [#allocation12], 0
    %18 = vsyncpa [#allocation4], 0
    // Predicated region
    $region2: #{tpu_custom_call.1} parent=1 // pred_check
      _
    $region3: #{tpu_custom_call.1} parent=1 // pred_check_branch
      %20 = sbr.rel (0) target = $region5
    $region4: #{tpu_custom_call.1} parent=1 // pred_region
      %s22 = ssub.s32 128, 128
      %23 = vsyncadd [#allocation3], %s22
      %s25 = sshll.u32 [#allocation2], 4
      %s26 = int_to_ptr.vmem [resolvable:$true] %s25
      %28 = dma.hbm_to_vmem [thread:$0]  %s0, 128, %s26, [#allocation3]
    $region5: #{tpu_custom_call.1} parent=1 // pred_fallthru
      _
    // Predicated region
    $region6: #{tpu_custom_call.1} parent=1 // pred_check
      _
    $region7: #{tpu_custom_call.1} parent=1 // pred_check_branch
      %30 = sbr.rel (0) target = $region9
    $region8: #{tpu_custom_call.1} parent=1 // pred_region
      %s32 = ssub.s32 128, 128
      %33 = vsyncadd [#allocation6], %s32
      %s35 = sshll.u32 [#allocation5], 4
      %s36 = int_to_ptr.vmem [resolvable:$true] %s35
      %38 = dma.hbm_to_vmem [thread:$0]  %s1, 128, %s36, [#allocation6]
    $region9: #{tpu_custom_call.1} parent=1 // pred_fallthru
      _
    // Predicated region
    $region10: #{tpu_custom_call.1} parent=1 // pred_check
      _
    $region11: #{tpu_custom_call.1} parent=1 // pred_check_branch
      %40 = sbr.rel (0) target = $region13
    $region12: #{tpu_custom_call.1} parent=1 // pred_region
      %s42 = ssub.s32 256, 256
      %43 = vsyncadd [#allocation6], %s42
      %s44 = sshll.u32 [#allocation7], 4
      %s45 = int_to_ptr.vmem [resolvable:$true] %s44
      %50 = dma.hbm_to_vmem [thread:$0]  %s2, 256, %s45, [#allocation6], 64, 64, 4
    $region13: #{tpu_custom_call.1} parent=1 // pred_fallthru
      _
    // Predicated region
    $region14: #{tpu_custom_call.1} parent=1 // pred_check
      _
    $region15: #{tpu_custom_call.1} parent=1 // pred_check_branch
      %52 = sbr.rel (0) target = $region17
    $region16: #{tpu_custom_call.1} parent=1 // pred_region
      _
    $region17: #{tpu_custom_call.1} parent=1 // pred_fallthru
      _
    // Predicated region
    $region18: #{tpu_custom_call.1} parent=1 // pred_check
      _
    $region19: #{tpu_custom_call.1} parent=1 // pred_check_branch
      %54 = sbr.rel (0) target = $region21
    $region20: #{tpu_custom_call.1} parent=1 // pred_region
      %s56 = ssub.s32 512, 512
      %57 = vsyncadd [#allocation9], %s56
      %s58 = sshll.u32 [#allocation8], 4
      %s59 = int_to_ptr.vmem [resolvable:$true] %s58
      %64 = dma.hbm_to_vmem [thread:$0]  %s4, 512, %s59, [#allocation9], 128, 128, 8
    $region21: #{tpu_custom_call.1} parent=1 // pred_fallthru
      _
    // Predicated region
    $region22: #{tpu_custom_call.1} parent=1 // pred_check
      _
    $region23: #{tpu_custom_call.1} parent=1 // pred_check_branch
      %66 = sbr.rel (0) target = $region25
    $region24: #{tpu_custom_call.1} parent=1 // pred_region
      _
    $region25: #{tpu_custom_call.1} parent=1 // pred_fallthru
      _
    // Predicated region
    $region26: #{tpu_custom_call.1} parent=1 // pred_check
      _
    $region27: #{tpu_custom_call.1} parent=1 // pred_check_branch
      %68 = sbr.rel (0) target = $region29
    $region28: #{tpu_custom_call.1} parent=1 // pred_region
      %s70 = ssub.s32 1024, 1024
      %71 = vsyncadd [#allocation9], %s70
      %s72 = sshll.u32 [#allocation10], 4
      %s73 = int_to_ptr.vmem [resolvable:$true] %s72
      %78 = dma.hbm_to_vmem [thread:$0]  %s6, 1024, %s73, [#allocation9], 64, 64, 4
    $region29: #{tpu_custom_call.1} parent=1 // pred_fallthru
      _
    // Predicated region
    $region30: #{tpu_custom_call.1} parent=1 // pred_check
      _
    $region31: #{tpu_custom_call.1} parent=1 // pred_check_branch
      %80 = sbr.rel (0) target = $region33
    $region32: #{tpu_custom_call.1} parent=1 // pred_region
      %s82 = ssub.s32 1024, 1024
      %83 = vsyncadd [#allocation12], %s82
      %s84 = sshll.u32 [#allocation11], 4
      %s85 = int_to_ptr.vmem [resolvable:$true] %s84
      %90 = dma.hbm_to_vmem [thread:$0]  %s7, 1024, %s85, [#allocation12], 64, 64, 4
    $region33: #{tpu_custom_call.1} parent=1 // pred_fallthru
      _
    // Predicated region
    $region34: #{tpu_custom_call.1} parent=1 // pred_check
      _
    $region35: #{tpu_custom_call.1} parent=1 // pred_check_branch
      %92 = sbr.rel (0) target = $region37
    $region36: #{tpu_custom_call.1} parent=1 // pred_region
      %s94 = ssub.s32 1024, 1024
      %95 = vsyncadd [#allocation12], %s94
      %s96 = sshll.u32 [#allocation13], 4
      %s97 = int_to_ptr.vmem [resolvable:$true] %s96
      %102 = dma.hbm_to_vmem [thread:$0]  %s8, 1024, %s97, [#allocation12], 64, 64, 4
    $region37: #{tpu_custom_call.1} parent=1 // pred_fallthru
      _
    // Predicated region
    $region38: #{tpu_custom_call.1} parent=1 // pred_check
      _
    $region39: #{tpu_custom_call.1} parent=1 // pred_check_branch
      %104 = sbr.rel (0) target = $region41
    $region40: #{tpu_custom_call.1} parent=1 // pred_region
      %105 = dma.done [#allocation3], 128
    $region41: #{tpu_custom_call.1} parent=1 // pred_fallthru
      _
    // Predicated region
    $region42: #{tpu_custom_call.1} parent=1 // pred_check
      _
    $region43: #{tpu_custom_call.1} parent=1 // pred_check_branch
      %107 = sbr.rel (0) target = $region45
    $region44: #{tpu_custom_call.1} parent=1 // pred_region
      %108 = dma.done [#allocation6], 128
    $region45: #{tpu_custom_call.1} parent=1 // pred_fallthru
      _
    // Predicated region
    $region46: #{tpu_custom_call.1} parent=1 // pred_check
      _
    $region47: #{tpu_custom_call.1} parent=1 // pred_check_branch
      %110 = sbr.rel (0) target = $region49
    $region48: #{tpu_custom_call.1} parent=1 // pred_region
      %111 = dma.done [#allocation6], 256
    $region49: #{tpu_custom_call.1} parent=1 // pred_fallthru
      _
    // Predicated region
    $region50: #{tpu_custom_call.1} parent=1 // pred_check
      _
    $region51: #{tpu_custom_call.1} parent=1 // pred_check_branch
      %113 = sbr.rel (0) target = $region53
    $region52: #{tpu_custom_call.1} parent=1 // pred_region
      %114 = dma.done [#allocation9], 512
    $region53: #{tpu_custom_call.1} parent=1 // pred_fallthru
      _
    // Predicated region
    $region54: #{tpu_custom_call.1} parent=1 // pred_check
      _
    $region55: #{tpu_custom_call.1} parent=1 // pred_check_branch
      %116 = sbr.rel (0) target = $region57
    $region56: #{tpu_custom_call.1} parent=1 // pred_region
      %117 = dma.done [#allocation9], 1024
    $region57: #{tpu_custom_call.1} parent=1 // pred_fallthru
      _
    // Predicated region
    $region58: #{tpu_custom_call.1} parent=1 // pred_check
      _
    $region59: #{tpu_custom_call.1} parent=1 // pred_check_branch
      %119 = sbr.rel (0) target = $region61
    $region60: #{tpu_custom_call.1} parent=1 // pred_region
      %120 = dma.done [#allocation12], 1024
    $region61: #{tpu_custom_call.1} parent=1 // pred_fallthru
      _
    // Predicated region
    $region62: #{tpu_custom_call.1} parent=1 // pred_check
      _
    $region63: #{tpu_custom_call.1} parent=1 // pred_check_branch
      %122 = sbr.rel (0) target = $region65
    $region64: #{tpu_custom_call.1} parent=1 // pred_region
      %123 = dma.done [#allocation12], 1024
    $region65: #{tpu_custom_call.1} parent=1 // pred_fallthru
      _
    %v125 = vld [vmem:[#allocation2] sm:$0xff]
    %v126 = vpack.c.bf16 %v125, %v125
    %v127 = vld [vmem:[#allocation5] sm:$0xff]
    %v128 = vpack.c.bf16 %v127, %v127
    %v129 = vld [vmem:[#allocation7] sm:$0xf]
    %v130 = vld [vmem:[#allocation7 + $0x4] sm:$0xf]
    %v131 = vld [vmem:[#allocation7 + $0x8] sm:$0xf]
    %v132 = vld [vmem:[#allocation7 + $0xc] sm:$0xf]
    %v133 = vld [vmem:[%s3] sm:$0x1]
    %v135 = vlaneseq
    %v136 = vshrl.u32 %v135, 7
    %v137 = vsub.s32 0, %v136
    %v138 = vrot.slane %v133, %v137
    %v144 = vunpack.c.l.b16 %v129
    %v145 = vunpack.c.l.b16 %v130
    %v146 = vunpack.c.l.b16 %v131
    %v147 = vunpack.c.l.b16 %v132
    %v148 = vpack.c.b16 %v145, %v144
    %v149 = vpack.c.b16 %v147, %v146
    %vm152 = vcmask 261120
    %v154 = vsel %vm152, %v126, 0
    %156 = vmatprep.subr.bf16.mxu0 0
    %157 = vmatpush1.bf16.msra.mxu0 0
    %158 = vmatprep.subr.bf16.mxu0 0
    %159 = vmatpush1.bf16.msra.mxu0 0
    %160 = vmatprep.subr.bf16.mxu0 0
    %161 = vmatpush1.bf16.msra.mxu0 0
    %162 = vmatprep.subr.bf16.mxu0 0
    %163 = vmatpush1.bf16.msra.mxu0 0
    %164 = vmatprep.subr.bf16.mxu0 0
    %165 = vmatpush1.bf16.msra.mxu0 0
    %166 = vmatprep.subr.bf16.mxu0 0
    %167 = vmatpush1.bf16.msra.mxu0 0
    %168 = vmatprep.subr.bf16.mxu0 0
    %169 = vmatpush1.bf16.msra.mxu0 %v149
    %170 = vmatprep.subr.bf16.mxu0 0
    %171 = vmatpush1.bf16.msra.mxu0 %v148
    %172 = vmatprep.subr.bf16.mxu0 0
    %173 = vmatpush2.bf16.msra.mxu0 0
    %174 = vmatprep.subr.bf16.mxu0 0
    %175 = vmatpush2.bf16.msra.mxu0 0
    %176 = vmatprep.subr.bf16.mxu0 0
    %177 = vmatpush2.bf16.msra.mxu0 0
    %178 = vmatprep.subr.bf16.mxu0 0
    %179 = vmatpush2.bf16.msra.mxu0 0
    %180 = vmatprep.subr.bf16.mxu0 0
    %181 = vmatpush2.bf16.msra.mxu0 0
    %182 = vmatprep.subr.bf16.mxu0 0
    %183 = vmatpush2.bf16.msra.mxu0 0
    %184 = vmatprep.subr.bf16.mxu0 0
    %185 = vmatpush2.bf16.msra.mxu0 0
    %186 = vmatprep.subr.bf16.mxu0 0
    %187 = vmatpush2.bf16.msra.mxu0 0
    %188 = vmatprep.mubr.bf16.mxu0 0
    %189 = vmatmul.mubr.bf16.gmra.mxu0 %v154
    %v190 = vpop.f32.mrf.mxu0
    %v191 = vadd.f32 %v138, %v190
    %v192 = vpop.f32.mrf.mxu0
    %v193 = vpop.f32.mrf.mxu0
    %v194 = vpop.f32.mrf.mxu0
    %195 = vdwg.mxu0
    %v196 = vld [vmem:[#allocation8] sm:$0xff]
    %v197 = vld [vmem:[#allocation8 + $0x8] sm:$0xff]
    %v198 = vld [vmem:[#allocation8 + $0x10] sm:$0xff]
    %v199 = vld [vmem:[#allocation8 + $0x18] sm:$0xff]
    %v200 = vld [vmem:[%s5] sm:$0x3]
    %v202 = vlaneseq
    %v203 = vshrl.u32 %v202, 7
    %v204 = vsub.s32 0, %v203
    %v205 = vrot.slane %v200, %v204
    %v206 = vlaneseq
    %v207 = vshrl.u32 %v206, 7
    %v208 = vsub.s32 1, %v207
    %v209 = vrot.slane %v200, %v208
    %v216 = vunpack.c.l.b16 %v196
    %v217 = vunpack.c.h.b16 %v196
    %v218 = vunpack.c.l.b16 %v197
    %v219 = vunpack.c.h.b16 %v197
    %v220 = vunpack.c.l.b16 %v198
    %v221 = vunpack.c.h.b16 %v198
    %v222 = vunpack.c.l.b16 %v199
    %v223 = vunpack.c.h.b16 %v199
    %v224 = vpack.c.b16 %v218, %v216
    %v225 = vpack.c.b16 %v219, %v217
    %v226 = vpack.c.b16 %v222, %v220
    %v227 = vpack.c.b16 %v223, %v221
    %v233 = vsel %vm152, %v128, 0
    %235 = vmatprep.subr.bf16.mxu0 0
    %236 = vmatpush1.bf16.msra.mxu0 0
    %237 = vmatprep.subr.bf16.mxu0 0
    %238 = vmatpush1.bf16.msra.mxu0 0
    %239 = vmatprep.subr.bf16.mxu0 0
    %240 = vmatpush1.bf16.msra.mxu0 0
    %241 = vmatprep.subr.bf16.mxu0 0
    %242 = vmatpush1.bf16.msra.mxu0 0
    %243 = vmatprep.subr.bf16.mxu0 0
    %244 = vmatpush1.bf16.msra.mxu0 0
    %245 = vmatprep.subr.bf16.mxu0 0
    %246 = vmatpush1.bf16.msra.mxu0 0
    %247 = vmatprep.subr.bf16.mxu0 %v227
    %248 = vmatpush1.bf16.msra.mxu0 %v226
    %249 = vmatprep.subr.bf16.mxu0 %v225
    %250 = vmatpush1.bf16.msra.mxu0 %v224
    %251 = vmatprep.subr.bf16.mxu0 0
    %252 = vmatpush2.bf16.msra.mxu0 0
    %253 = vmatprep.subr.bf16.mxu0 0
    %254 = vmatpush2.bf16.msra.mxu0 0
    %255 = vmatprep.subr.bf16.mxu0 0
    %256 = vmatpush2.bf16.msra.mxu0 0
    %257 = vmatprep.subr.bf16.mxu0 0
    %258 = vmatpush2.bf16.msra.mxu0 0
    %259 = vmatprep.subr.bf16.mxu0 0
    %260 = vmatpush2.bf16.msra.mxu0 0
    %261 = vmatprep.subr.bf16.mxu0 0
    %262 = vmatpush2.bf16.msra.mxu0 0
    %263 = vmatprep.subr.bf16.mxu0 0
    %264 = vmatpush2.bf16.msra.mxu0 0
    %265 = vmatprep.subr.bf16.mxu0 0
    %266 = vmatpush2.bf16.msra.mxu0 0
    %267 = vmatprep.mubr.bf16.mxu0 0
    %268 = vmatmul.mubr.bf16.gmra.mxu0 %v233
    %v269 = vpop.f32.mrf.mxu0
    %v270 = vadd.f32 %v205, %v269
    %v271 = vpop.f32.mrf.mxu0
    %v272 = vadd.f32 %v209, %v271
    %v273 = vpop.f32.mrf.mxu0
    %v274 = vpop.f32.mrf.mxu0
    %275 = vdwg.mxu0
    %v276 = vmul.f32 %v191, %v270
    %v277 = vpack.c.bf16 %v276, %v276
    %v278 = vld [vmem:[#allocation10] sm:$0xf]
    %v279 = vld [vmem:[#allocation10 + $0x4] sm:$0xf]
    %v280 = vld [vmem:[#allocation10 + $0x8] sm:$0xf]
    %v281 = vld [vmem:[#allocation10 + $0xc] sm:$0xf]
    %v282 = vld [vmem:[#allocation10 + $0x10] sm:$0xf]
    %v283 = vld [vmem:[#allocation10 + $0x14] sm:$0xf]
    %v284 = vld [vmem:[#allocation10 + $0x18] sm:$0xf]
    %v285 = vld [vmem:[#allocation10 + $0x1c] sm:$0xf]
    %v286 = vld [vmem:[#allocation10 + $0x20] sm:$0xf]
    %v287 = vld [vmem:[#allocation10 + $0x24] sm:$0xf]
    %v288 = vld [vmem:[#allocation10 + $0x28] sm:$0xf]
    %v289 = vld [vmem:[#allocation10 + $0x2c] sm:$0xf]
    %v290 = vld [vmem:[#allocation10 + $0x30] sm:$0xf]
    %v291 = vld [vmem:[#allocation10 + $0x34] sm:$0xf]
    %v292 = vld [vmem:[#allocation10 + $0x38] sm:$0xf]
    %v293 = vld [vmem:[#allocation10 + $0x3c] sm:$0xf]
    %v310 = vunpack.c.l.b16 %v278
    %v311 = vunpack.c.l.b16 %v279
    %v312 = vunpack.c.l.b16 %v280
    %v313 = vunpack.c.l.b16 %v281
    %v314 = vunpack.c.l.b16 %v282
    %v315 = vunpack.c.l.b16 %v283
    %v316 = vunpack.c.l.b16 %v284
    %v317 = vunpack.c.l.b16 %v285
    %v318 = vunpack.c.l.b16 %v286
    %v319 = vunpack.c.l.b16 %v287
    %v320 = vunpack.c.l.b16 %v288
    %v321 = vunpack.c.l.b16 %v289
    %v322 = vunpack.c.l.b16 %v290
    %v323 = vunpack.c.l.b16 %v291
    %v324 = vunpack.c.l.b16 %v292
    %v325 = vunpack.c.l.b16 %v293
    %v326 = vpack.c.b16 %v311, %v310
    %v327 = vpack.c.b16 %v313, %v312
    %v328 = vpack.c.b16 %v315, %v314
    %v329 = vpack.c.b16 %v317, %v316
    %v330 = vpack.c.b16 %v319, %v318
    %v331 = vpack.c.b16 %v321, %v320
    %v332 = vpack.c.b16 %v323, %v322
    %v333 = vpack.c.b16 %v325, %v324
    %342 = vmatprep.subr.bf16.mxu0 0
    %343 = vmatpush1.bf16.msra.mxu0 %v333
    %344 = vmatprep.subr.bf16.mxu0 0
    %345 = vmatpush1.bf16.msra.mxu0 %v332
    %346 = vmatprep.subr.bf16.mxu0 0
    %347 = vmatpush1.bf16.msra.mxu0 %v331
    %348 = vmatprep.subr.bf16.mxu0 0
    %349 = vmatpush1.bf16.msra.mxu0 %v330
    %350 = vmatprep.subr.bf16.mxu0 0
    %351 = vmatpush1.bf16.msra.mxu0 %v329
    %352 = vmatprep.subr.bf16.mxu0 0
    %353 = vmatpush1.bf16.msra.mxu0 %v328
    %354 = vmatprep.subr.bf16.mxu0 0
    %355 = vmatpush1.bf16.msra.mxu0 %v327
    %356 = vmatprep.subr.bf16.mxu0 0
    %357 = vmatpush1.bf16.msra.mxu0 %v326
    %358 = vmatprep.subr.bf16.mxu0 0
    %359 = vmatpush2.bf16.msra.mxu0 0
    %360 = vmatprep.subr.bf16.mxu0 0
    %361 = vmatpush2.bf16.msra.mxu0 0
    %362 = vmatprep.subr.bf16.mxu0 0
    %363 = vmatpush2.bf16.msra.mxu0 0
    %364 = vmatprep.subr.bf16.mxu0 0
    %365 = vmatpush2.bf16.msra.mxu0 0
    %366 = vmatprep.subr.bf16.mxu0 0
    %367 = vmatpush2.bf16.msra.mxu0 0
    %368 = vmatprep.subr.bf16.mxu0 0
    %369 = vmatpush2.bf16.msra.mxu0 0
    %370 = vmatprep.subr.bf16.mxu0 0
    %371 = vmatpush2.bf16.msra.mxu0 0
    %372 = vmatprep.subr.bf16.mxu0 0
    %373 = vmatpush2.bf16.msra.mxu0 0
    %374 = vmatprep.mubr.bf16.mxu0 0
    %375 = vmatmul.mubr.bf16.gmra.mxu0 %v277
    %v376 = vpop.f32.mrf.mxu0
    %v377 = vadd.f32 0.0, %v376
    %v378 = vpop.f32.mrf.mxu0
    %v379 = vpop.f32.mrf.mxu0
    %v380 = vpop.f32.mrf.mxu0
    %381 = vdwg.mxu0
    %382 = vmax.xlane.f32.xlu0 %v377
    %v383 = vpop.xlane.xlu0 %382
    %v384 = vsub.f32 %v377, %v383
    %v385 = vmax.f32 %v384, -60.0
    %v386 = vmul.f32 %v385, 1.442695
    %v387 = vpow.pop %v386
    %v388 = vmul.f32 %v387, %v272
    %v389 = vpack.c.bf16 %v388, %v388
    %v390 = vld [vmem:[#allocation13] sm:$0xf]
    %v391 = vld [vmem:[#allocation13 + $0x4] sm:$0xf]
    %v392 = vld [vmem:[#allocation13 + $0x8] sm:$0xf]
    %v393 = vld [vmem:[#allocation13 + $0xc] sm:$0xf]
    %v394 = vld [vmem:[#allocation13 + $0x10] sm:$0xf]
    %v395 = vld [vmem:[#allocation13 + $0x14] sm:$0xf]
    %v396 = vld [vmem:[#allocation13 + $0x18] sm:$0xf]
    %v397 = vld [vmem:[#allocation13 + $0x1c] sm:$0xf]
    %v398 = vld [vmem:[#allocation13 + $0x20] sm:$0xf]
    %v399 = vld [vmem:[#allocation13 + $0x24] sm:$0xf]
    %v400 = vld [vmem:[#allocation13 + $0x28] sm:$0xf]
    %v401 = vld [vmem:[#allocation13 + $0x2c] sm:$0xf]
    %v402 = vld [vmem:[#allocation13 + $0x30] sm:$0xf]
    %v403 = vld [vmem:[#allocation13 + $0x34] sm:$0xf]
    %v404 = vld [vmem:[#allocation13 + $0x38] sm:$0xf]
    %v405 = vld [vmem:[#allocation13 + $0x3c] sm:$0xf]
    %v422 = vunpack.c.l.b16 %v390
    %v423 = vunpack.c.l.b16 %v391
    %v424 = vunpack.c.l.b16 %v392
    %v425 = vunpack.c.l.b16 %v393
    %v426 = vunpack.c.l.b16 %v394
    %v427 = vunpack.c.l.b16 %v395
    %v428 = vunpack.c.l.b16 %v396
    %v429 = vunpack.c.l.b16 %v397
    %v430 = vunpack.c.l.b16 %v398
    %v431 = vunpack.c.l.b16 %v399
    %v432 = vunpack.c.l.b16 %v400
    %v433 = vunpack.c.l.b16 %v401
    %v434 = vunpack.c.l.b16 %v402
    %v435 = vunpack.c.l.b16 %v403
    %v436 = vunpack.c.l.b16 %v404
    %v437 = vunpack.c.l.b16 %v405
    %v438 = vpack.c.b16 %v423, %v422
    %v439 = vpack.c.b16 %v425, %v424
    %v440 = vpack.c.b16 %v427, %v426
    %v441 = vpack.c.b16 %v429, %v428
    %v442 = vpack.c.b16 %v431, %v430
    %v443 = vpack.c.b16 %v433, %v432
    %v444 = vpack.c.b16 %v435, %v434
    %v445 = vpack.c.b16 %v437, %v436
    %454 = vmatprep.subr.bf16.mxu0 0
    %455 = vmatpush1.bf16.msra.mxu0 %v445
    %456 = vmatprep.subr.bf16.mxu0 0
    %457 = vmatpush1.bf16.msra.mxu0 %v444
    %458 = vmatprep.subr.bf16.mxu0 0
    %459 = vmatpush1.bf16.msra.mxu0 %v443
    %460 = vmatprep.subr.bf16.mxu0 0
    %461 = vmatpush1.bf16.msra.mxu0 %v442
    %462 = vmatprep.subr.bf16.mxu0 0
    %463 = vmatpush1.bf16.msra.mxu0 %v441
    %464 = vmatprep.subr.bf16.mxu0 0
    %465 = vmatpush1.bf16.msra.mxu0 %v440
    %466 = vmatprep.subr.bf16.mxu0 0
    %467 = vmatpush1.bf16.msra.mxu0 %v439
    %468 = vmatprep.subr.bf16.mxu0 0
    %469 = vmatpush1.bf16.msra.mxu0 %v438
    %470 = vmatprep.subr.bf16.mxu0 0
    %471 = vmatpush2.bf16.msra.mxu0 0
    %472 = vmatprep.subr.bf16.mxu0 0
    %473 = vmatpush2.bf16.msra.mxu0 0
    %474 = vmatprep.subr.bf16.mxu0 0
    %475 = vmatpush2.bf16.msra.mxu0 0
    %476 = vmatprep.subr.bf16.mxu0 0
    %477 = vmatpush2.bf16.msra.mxu0 0
    %478 = vmatprep.subr.bf16.mxu0 0
    %479 = vmatpush2.bf16.msra.mxu0 0
    %480 = vmatprep.subr.bf16.mxu0 0
    %481 = vmatpush2.bf16.msra.mxu0 0
    %482 = vmatprep.subr.bf16.mxu0 0
    %483 = vmatpush2.bf16.msra.mxu0 0
    %484 = vmatprep.subr.bf16.mxu0 0
    %485 = vmatpush2.bf16.msra.mxu0 0
    %486 = vmatprep.mubr.bf16.mxu0 0
    %487 = vmatmul.mubr.bf16.gmra.mxu0 %v389
    %v488 = vpop.f32.mrf.mxu0
    %v489 = vadd.f32 0.0, %v488
    %v490 = vpop.f32.mrf.mxu0
    %v491 = vpop.f32.mrf.mxu0
    %v492 = vpop.f32.mrf.mxu0
    %493 = vdwg.mxu0
    %v494 = vpack.c.bf16 %v387, %v387
    %v495 = vld [vmem:[#allocation11] sm:$0xf]
    %v496 = vld [vmem:[#allocation11 + $0x4] sm:$0xf]
    %v497 = vld [vmem:[#allocation11 + $0x8] sm:$0xf]
    %v498 = vld [vmem:[#allocation11 + $0xc] sm:$0xf]
    %v499 = vld [vmem:[#allocation11 + $0x10] sm:$0xf]
    %v500 = vld [vmem:[#allocation11 + $0x14] sm:$0xf]
    %v501 = vld [vmem:[#allocation11 + $0x18] sm:$0xf]
    %v502 = vld [vmem:[#allocation11 + $0x1c] sm:$0xf]
    %v503 = vld [vmem:[#allocation11 + $0x20] sm:$0xf]
    %v504 = vld [vmem:[#allocation11 + $0x24] sm:$0xf]
    %v505 = vld [vmem:[#allocation11 + $0x28] sm:$0xf]
    %v506 = vld [vmem:[#allocation11 + $0x2c] sm:$0xf]
    %v507 = vld [vmem:[#allocation11 + $0x30] sm:$0xf]
    %v508 = vld [vmem:[#allocation11 + $0x34] sm:$0xf]
    %v509 = vld [vmem:[#allocation11 + $0x38] sm:$0xf]
    %v510 = vld [vmem:[#allocation11 + $0x3c] sm:$0xf]
    %v527 = vunpack.c.l.b16 %v495
    %v528 = vunpack.c.l.b16 %v496
    %v529 = vunpack.c.l.b16 %v497
    %v530 = vunpack.c.l.b16 %v498
    %v531 = vunpack.c.l.b16 %v499
    %v532 = vunpack.c.l.b16 %v500
    %v533 = vunpack.c.l.b16 %v501
    %v534 = vunpack.c.l.b16 %v502
    %v535 = vunpack.c.l.b16 %v503
    %v536 = vunpack.c.l.b16 %v504
    %v537 = vunpack.c.l.b16 %v505
    %v538 = vunpack.c.l.b16 %v506
    %v539 = vunpack.c.l.b16 %v507
    %v540 = vunpack.c.l.b16 %v508
    %v541 = vunpack.c.l.b16 %v509
    %v542 = vunpack.c.l.b16 %v510
    %v543 = vpack.c.b16 %v528, %v527
    %v544 = vpack.c.b16 %v530, %v529
    %v545 = vpack.c.b16 %v532, %v531
    %v546 = vpack.c.b16 %v534, %v533
    %v547 = vpack.c.b16 %v536, %v535
    %v548 = vpack.c.b16 %v538, %v537
    %v549 = vpack.c.b16 %v540, %v539
    %v550 = vpack.c.b16 %v542, %v541
    %559 = vmatprep.subr.bf16.mxu0 0
    %560 = vmatpush1.bf16.msra.mxu0 %v550
    %561 = vmatprep.subr.bf16.mxu0 0
    %562 = vmatpush1.bf16.msra.mxu0 %v549
    %563 = vmatprep.subr.bf16.mxu0 0
    %564 = vmatpush1.bf16.msra.mxu0 %v548
    %565 = vmatprep.subr.bf16.mxu0 0
    %566 = vmatpush1.bf16.msra.mxu0 %v547
    %567 = vmatprep.subr.bf16.mxu0 0
    %568 = vmatpush1.bf16.msra.mxu0 %v546
    %569 = vmatprep.subr.bf16.mxu0 0
    %570 = vmatpush1.bf16.msra.mxu0 %v545
    %571 = vmatprep.subr.bf16.mxu0 0
    %572 = vmatpush1.bf16.msra.mxu0 %v544
    %573 = vmatprep.subr.bf16.mxu0 0
    %574 = vmatpush1.bf16.msra.mxu0 %v543
    %575 = vmatprep.subr.bf16.mxu0 0
    %576 = vmatpush2.bf16.msra.mxu0 0
    %577 = vmatprep.subr.bf16.mxu0 0
    %578 = vmatpush2.bf16.msra.mxu0 0
    %579 = vmatprep.subr.bf16.mxu0 0
    %580 = vmatpush2.bf16.msra.mxu0 0
    %581 = vmatprep.subr.bf16.mxu0 0
    %582 = vmatpush2.bf16.msra.mxu0 0
    %583 = vmatprep.subr.bf16.mxu0 0
    %584 = vmatpush2.bf16.msra.mxu0 0
    %585 = vmatprep.subr.bf16.mxu0 0
    %586 = vmatpush2.bf16.msra.mxu0 0
    %587 = vmatprep.subr.bf16.mxu0 0
    %588 = vmatpush2.bf16.msra.mxu0 0
    %589 = vmatprep.subr.bf16.mxu0 0
    %590 = vmatpush2.bf16.msra.mxu0 0
    %591 = vmatprep.mubr.bf16.mxu0 0
    %592 = vmatmul.mubr.bf16.gmra.mxu0 %v494
    %v593 = vpop.f32.mrf.mxu0
    %v594 = vadd.f32 0.0, %v593
    %v595 = vpop.f32.mrf.mxu0
    %v596 = vpop.f32.mrf.mxu0
    %v597 = vpop.f32.mrf.mxu0
    %598 = vdwg.mxu0
    %v599 = vrcp.pop %v594
    %v600 = vmul.f32 %v489, %v599
    %601 = vst [vmem:[#allocation14] sm:$0xff] %v600
    // Predicated region
    $region66: #{tpu_custom_call.1} parent=1 // pred_check
      _
    $region67: #{tpu_custom_call.1} parent=1 // pred_check_branch
      %603 = sbr.rel (0) target = $region69
    $region68: #{tpu_custom_call.1} parent=1 // pred_region
      %s605 = ssub.s32 128, 128
      %606 = vsyncadd [#allocation4], %s605
      %s608 = sshll.u32 [#allocation14], 4
      %s609 = int_to_ptr.vmem [resolvable:$true] %s608
      %611 = dma.vmem_to_hbm [thread:$0]  %s609, 128, %s9, [#allocation4]
    $region69: #{tpu_custom_call.1} parent=1 // pred_fallthru
      _
    // Predicated region
    $region70: #{tpu_custom_call.1} parent=1 // pred_check
      _
    $region71: #{tpu_custom_call.1} parent=1 // pred_check_branch
      %613 = sbr.rel (0) target = $region73
    $region72: #{tpu_custom_call.1} parent=1 // pred_region
      %614 = dma.done [#allocation4], 128
    $region73: #{tpu_custom_call.1} parent=1 // pred_fallthru
      _
    %615 = vsyncpa [#allocation3], 1
    %616 = vsyncpa [#allocation6], 1
    %617 = vsyncpa [#allocation9], 1
    %618 = vsyncpa [#allocation12], 1
    %619 = vsyncpa [#allocation4], 1

</llo_original>
